<compile_context>
chip_gen: v7x
topology: tpu7x:2x2x1
jax: 0.10.0
libtpu: 0.0.40
codegen_flags: <defaults>
</compile_context>

<pallas_src>
import math

import jax
import jax.numpy as jnp
from jax.experimental import pallas as pl
from jax.experimental.pallas import tpu as pltpu


_LANE_CAP = 1024        # lane width cap (multiple of the 128-lane vreg width)
_MAX_BLOCK_ROWS = 512   # 512 x 1024 f32 = 2 MiB/block; ~8 MiB live with double-buffering


def _eqlr_kernel(scale_ref, x_ref, o_ref):
    # scale_ref: (1, 1) f32 in SMEM; x_ref / o_ref: (block_rows, lane) VMEM tiles.
    # Multiply in f32, round once per element (VPU has huge slack; kernel is DMA-bound).
    o_ref[...] = (x_ref[...].astype(jnp.float32) * scale_ref[0, 0]).astype(o_ref.dtype)


def _sublane_multiple(dtype):
    # Minimum second-to-last tile dim: 8 for 32-bit, 16 for 16-bit, 32 for 8-bit dtypes.
    return max(8, 32 // jnp.dtype(dtype).itemsize)


@jax.jit
def equalized_lr_forward(x, norm_constant):
    """y = norm_constant * x, elementwise, computed on-chip with Pallas."""
    orig_shape = x.shape
    dtype = x.dtype
    numel = int(x.size)
    scale = jnp.asarray(norm_constant, jnp.float32).reshape(1, 1)

    # Element counts not divisible by the 128-lane width can't be viewed as a
    # lane-dense 2D slab without a pad + slice (each a full extra read+write),
    # so let XLA do the broadcast multiply directly for those shapes.
    if numel == 0 or numel % 128 != 0:
        return (scale[0, 0] * x.astype(jnp.float32)).astype(dtype)

    # Largest lane width (multiple of 128, <= cap) that divides numel exactly.
    lane = 128
    for m in range(_LANE_CAP // 128, 0, -1):
        if numel % (128 * m) == 0:
            lane = 128 * m
            break
    rows = numel // lane
    xf = x.reshape(rows, lane)  # metadata-only reshape under jit; no HBM traffic

    sub = _sublane_multiple(dtype)
    if rows <= _MAX_BLOCK_ROWS:
        block_rows = rows                              # single full-array block (always legal)
    else:
        block_rows = (_MAX_BLOCK_ROWS // sub) * sub    # sublane-aligned big block

    grid = (pl.cdiv(rows, block_rows),)                # ragged tail is masked by Pallas
    itemsize = jnp.dtype(dtype).itemsize

    out = pl.pallas_call(
        _eqlr_kernel,
        out_shape=jax.ShapeDtypeStruct((rows, lane), dtype),
        grid=grid,
        in_specs=[
            pl.BlockSpec(memory_space=pltpu.MemorySpace.SMEM),     # scalar norm constant
            pl.BlockSpec((block_rows, lane), lambda i: (i, 0)),    # lane-dense input block
        ],
        out_specs=pl.BlockSpec((block_rows, lane), lambda i: (i, 0)),
        compiler_params=pltpu.CompilerParams(dimension_semantics=("parallel",)),
        cost_estimate=pl.CostEstimate(
            flops=numel,
            transcendentals=0,
            bytes_accessed=2 * numel * itemsize,       # exact: no padding anywhere
        ),
    )(scale, xf)

    return out.reshape(orig_shape)


def make_equalized_lr_params(key, out_ch, in_ch, kh, kw):
    """Deterministically reproduce the module's __init__.

    kaiming_normal_(w, a=calculate_gain('conv2d')):
      calculate_gain('conv2d') == 1, gain = sqrt(2 / (1 + a^2)) = 1,
      std = gain / sqrt(fan_in)
    Then c = sqrt(mean(w**2)); weight is rescaled by 1/c (unused in forward);
    bias is dropped (bias_ ends up None in the reference).
    """
    fan_in = in_ch * kh * kw
    std = 1.0 / math.sqrt(fan_in)
    w = std * jax.random.normal(key, (out_ch, in_ch, kh, kw), dtype=jnp.float32)
    norm_constant = jnp.sqrt(jnp.mean(w * w))
    w_scaled = w / norm_constant  # kept for parity with __init__; not used in forward
    return w_scaled, norm_constant


if __name__ == "__main__":
    key = jax.random.PRNGKey(0)
    k_w, k_x, k_big = jax.random.split(key, 3)

    # Small shapes: batch=2, channels=4, spatial=16; wrapped layer = Conv2d(4, 4, 3)
    N, C, H, W = 2, 4, 16, 16
    _, norm_constant = make_equalized_lr_params(k_w, out_ch=C, in_ch=C, kh=3, kw=3)

    x = jax.random.normal(k_x, (N, C, H, W), dtype=jnp.float32)

    # TODO(synk): the reference's bias add (`x += self.bias.view(1, C, 1, 1)`) is dead
    # code (bias_ is always None and `self.bias` doesn't even exist), so it is omitted.
    y = equalized_lr_forward(x, norm_constant)
    y = jax.block_until_ready(y)

    expected = norm_constant * x
    assert y.shape == x.shape and y.dtype == x.dtype
    assert jnp.allclose(y, expected, atol=1e-6, rtol=1e-6), "mismatch vs reference"

    # Robustness check on a medium activation: exercises the multi-block grid
    # and the ragged (masked) last block: rows=1280, block_rows=512, grid=3.
    xb = jax.random.normal(k_big, (8, 16, 80, 128), dtype=jnp.float32)
    yb = jax.block_until_ready(equalized_lr_forward(xb, norm_constant))
    assert yb.shape == xb.shape and yb.dtype == xb.dtype
    assert jnp.allclose(yb, norm_constant * xb, atol=1e-6, rtol=1e-6), "mismatch (medium)"

    print("KERNEL_OK")
</pallas_src>

<mosaic_0001>
module attributes {stable_mosaic.version = 11 : i64} {
  func.func @_eqlr_kernel(%arg0: i32, %arg1: memref<1x1xf32, #tpu.memory_space<smem>>, %arg2: memref<2x1024xf32, #tpu.memory_space<vmem>>, %arg3: memref<2x1024xf32, #tpu.memory_space<vmem>>) attributes {dimension_semantics = [#tpu.dimension_semantics<parallel>], iteration_bounds = array<i64: 1>, scalar_prefetch = 0 : i64, scratch_operands = 0 : i64, tpu.core_type = #tpu.core_type<tc>, window_params = [{transform_indices = @transform_0, window_bounds = array<i64: 1, 1>}, {transform_indices = @transform_1, window_bounds = array<i64: 2, 1024>}, {transform_indices = @transform_2, window_bounds = array<i64: 2, 1024>}]} {
    %c0 = arith.constant 0 : index
    %c0_0 = arith.constant 0 : index
    %0 = vector.load %arg2[%c0, %c0_0] : memref<2x1024xf32, #tpu.memory_space<vmem>>, vector<2x1024xf32>
    %c0_1 = arith.constant 0 : index
    %c0_2 = arith.constant 0 : index
    %1 = memref.load %arg1[%c0_1, %c0_2] : memref<1x1xf32, #tpu.memory_space<smem>>
    %2 = vector.broadcast %1 : f32 to vector<2x1024xf32>
    %3 = arith.mulf %0, %2 : vector<2x1024xf32>
    %c0_3 = arith.constant 0 : index
    %c0_4 = arith.constant 0 : index
    %4 = vector.load %arg3[%c0_3, %c0_4] : memref<2x1024xf32, #tpu.memory_space<vmem>>, vector<2x1024xf32>
    tpu.vector_store %arg3[%c0_3, %c0_4], %3 {strides = array<i32>} : memref<2x1024xf32, #tpu.memory_space<vmem>>, vector<2x1024xf32>,
    return
  }
  func.func @transform_0(%arg0: i32) -> (i32, i32) {
    %c0_i32 = arith.constant 0 : i32
    %c0_i32_0 = arith.constant 0 : i32
    %c0_i32_1 = arith.constant 0 : i32
    return %c0_i32, %c0_i32_0 : i32, i32
  }
  func.func @transform_1(%arg0: i32) -> (i32, i32) {
    %c0_i32 = arith.constant 0 : i32
    %c0_i32_0 = arith.constant 0 : i32
    return %arg0, %c0_i32 : i32, i32
  }
  func.func @transform_2(%arg0: i32) -> (i32, i32) {
    %c0_i32 = arith.constant 0 : i32
    %c0_i32_0 = arith.constant 0 : i32
    return %arg0, %c0_i32 : i32, i32
  }
}

</mosaic_0001>

<llo_original>
// kernel: equalized_lr_forward.1
$region0: #{equalized_lr_forward.1}
  #allocation0 [shape = 'u32[]', space=smem, size = 0x4, offset = 0x4, fixed_abs, tag = 'smem constant byte address 0x4 - core index']
  #allocation1 [shape = 'u32[144,128]{1,0:T(1,128)}', space=vmem, size = 0x12000, scoped, tag = 'internal scratch']
  #allocation2 [shape = 'f32[1,1]{1,0:T(1,128)S(6)}', space=smem, size = 0x200, scoped, tag = 'scoped memory for equalized_lr_forward.1']
  %s0 = inlined_call_operand.<no memory space> [shape: f32[1,1], index: 0, kind: input, shape index: {}]
  %s1 = inlined_call_operand.vmem [shape: f32[2,1024], index: 1, kind: input, shape index: {}]
  %s2 = inlined_call_operand.vmem [shape: f32[2,1024], index: 2, kind: output, shape index: {}]
  %s3 = sld [smem:[#allocation0]]
  $region18: #{equalized_lr_forward.1} parent=0
    _
  %s5 = ssub.s32 1, %s3
  %s6 = scalar_select 0, %s5, %s3
  %7 = sst [smem:[#allocation2]] %s0
  // Predicated region
  $region2: #{equalized_lr_forward.1} parent=0 // pred_check
    _
  $region3: #{equalized_lr_forward.1} parent=0 // pred_check_branch
    %9 = sbr.rel (0) target = $region5
  $region4: #{equalized_lr_forward.1} parent=0 // pred_region
    _
  $region5: #{equalized_lr_forward.1} parent=0 // pred_fallthru
    _
  // Predicated region
  $region6: #{equalized_lr_forward.1} parent=0 // pred_check
    _
  $region7: #{equalized_lr_forward.1} parent=0 // pred_check_branch
    %11 = sbr.rel (0) target = $region9
  $region8: #{equalized_lr_forward.1} parent=0 // pred_region
    _
  $region9: #{equalized_lr_forward.1} parent=0 // pred_fallthru
    _
  %v12 = vld [vmem:[%s1] sm:$0xff]
  %v13 = vld [vmem:[%s1 + $0x8] sm:$0xff]
  %s14 = sld [smem:[#allocation2]]
  %v15 = vstv %s14
  %v16 = vmul.f32 %v12, %v15
  %v17 = vmul.f32 %v13, %v15
  %18 = vst [vmem:[%s2] sm:$0xff] %v16
  %19 = vst [vmem:[%s2 + $0x8] sm:$0xff] %v17
  // Predicated region
  $region10: #{equalized_lr_forward.1} parent=0 // pred_check
    _
  $region11: #{equalized_lr_forward.1} parent=0 // pred_check_branch
    %21 = sbr.rel (0) target = $region13
  $region12: #{equalized_lr_forward.1} parent=0 // pred_region
    _
  $region13: #{equalized_lr_forward.1} parent=0 // pred_fallthru
    _
  // Predicated region
  $region14: #{equalized_lr_forward.1} parent=0 // pred_check
    _
  $region15: #{equalized_lr_forward.1} parent=0 // pred_check_branch
    %23 = sbr.rel (0) target = $region17
  $region16: #{equalized_lr_forward.1} parent=0 // pred_region
    _
  $region17: #{equalized_lr_forward.1} parent=0 // pred_fallthru
    _

</llo_original>
